<compile_context>
chip_gen: v6e
topology: v6e:2x2x1
jax: 0.10.0
libtpu: 0.0.40
codegen_flags: <defaults>
</compile_context>

<pallas_src>
import math

import jax
import jax.numpy as jnp
from jax.experimental import pallas as pl
from jax.experimental.pallas import tpu as pltpu


_INV_SQRT2 = 1.0 / math.sqrt(2.0)


def _gelu_exact(x):
    # nn.GELU() default is the exact erf formulation (keep bit-faithful
    # semantics; tanh-approx would also be fine if tolerance allowed).
    return 0.5 * x * (1.0 + jax.lax.erf(x * _INV_SQRT2))


def _round_up(x, m):
    return ((x + m - 1) // m) * m


def _pad2d(a, rows, cols):
    pr, pc = rows - a.shape[0], cols - a.shape[1]
    if pr == 0 and pc == 0:
        return a
    return jnp.pad(a, ((0, pr), (0, pc)))


def mlp_kernel(x_ref, w1_ref, b1_ref, w2_ref, b2_ref, o_ref, acc_ref):
    # x_ref:  (tm, D_in_p)   compute dtype (bf16 by default)
    # w1_ref: (D_in_p, th)   fc1 weight tile (in, out)
    # b1_ref: (1, th)        f32
    # w2_ref: (th, D_out_p)  fc2 weight tile (in, out)
    # b2_ref: (1, D_out_p)   f32
    # o_ref:  (tm, D_out_p)  output tile (resident across the hidden axis)
    # acc_ref:(tm, D_out_p)  f32 accumulator scratch
    h_idx = pl.program_id(1)

    @pl.when(h_idx == 0)
    def _init():
        acc_ref[...] = jnp.zeros_like(acc_ref)

    h = jnp.dot(x_ref[...], w1_ref[...], preferred_element_type=jnp.float32)
    h = _gelu_exact(h + b1_ref[...])
    # Dropout with p=0.0 is the identity -> no-op.
    acc_ref[...] += jnp.dot(h.astype(w2_ref.dtype), w2_ref[...],
                            preferred_element_type=jnp.float32)

    @pl.when(h_idx == pl.num_programs(1) - 1)
    def _finalize():
        o_ref[...] = (acc_ref[...] + b2_ref[...]).astype(o_ref.dtype)


def mlp_forward(x, w1, b1, w2, b2, *, tm=256, th=512,
                compute_dtype=jnp.bfloat16):
    """x: (B, S, D_in). w1: (D_in, H), b1: (H,), w2: (H, D_out), b2: (D_out,).
    Returns (B, S, D_out) in x.dtype."""
    B, S, D_in = x.shape
    H = w1.shape[1]
    D_out = w2.shape[1]
    M = B * S
    out_dtype = x.dtype

    # Lane-dense padded feature dims (multiples of 128).
    D_in_p = _round_up(D_in, 128)
    D_out_p = _round_up(D_out, 128)
    # Hidden tile / padded hidden dim (reduction axis).
    th = min(th, _round_up(H, 128))
    H_p = _round_up(H, th)
    # Row tile / padded row count (no divisibility assert: pad instead).
    tm = max(128, min(tm, _round_up(M, 128)))
    M_p = _round_up(M, tm)

    x2d = _pad2d(x.reshape(M, D_in), M_p, D_in_p).astype(compute_dtype)
    w1_p = _pad2d(w1, D_in_p, H_p).astype(compute_dtype)
    w2_p = _pad2d(w2, H_p, D_out_p).astype(compute_dtype)
    b1_p = _pad2d(b1.reshape(1, H), 1, H_p).astype(jnp.float32)
    b2_p = _pad2d(b2.reshape(1, D_out), 1, D_out_p).astype(jnp.float32)

    grid = (M_p // tm, H_p // th)

    # VMEM budget: double-buffered inputs/outputs + accumulator + hidden
    # intermediate, with 2x headroom, capped below v7x's 64 MiB physical VMEM.
    csz = jnp.dtype(compute_dtype).itemsize
    osz = jnp.dtype(out_dtype).itemsize
    vmem_bytes = (
        2 * tm * D_in_p * csz          # x tiles (double-buffered)
        + 2 * D_in_p * th * csz        # w1 tiles
        + 2 * th * D_out_p * csz       # w2 tiles
        + 2 * (th + D_out_p) * 4       # bias tiles
        + 2 * tm * D_out_p * osz       # output tiles
        + tm * D_out_p * 4             # f32 accumulator scratch
        + 2 * tm * th * 4              # hidden intermediate (f32)
    )
    vmem_limit = int(min(max(2 * vmem_bytes + (2 << 20), 16 << 20), 64 << 20))

    cost = pl.CostEstimate(
        flops=2 * M * (D_in * H + H * D_out),
        transcendentals=M * H,
        bytes_accessed=(M * D_in + D_in * H + H * D_out) * csz
                       + (H + D_out) * 4 + M * D_out * osz,
    )

    out2d = pl.pallas_call(
        mlp_kernel,
        out_shape=jax.ShapeDtypeStruct((M_p, D_out_p), out_dtype),
        grid_spec=pltpu.PrefetchScalarGridSpec(
            num_scalar_prefetch=0,
            grid=grid,
            in_specs=[
                pl.BlockSpec((tm, D_in_p), lambda i, j: (i, 0)),    # x rows
                pl.BlockSpec((D_in_p, th), lambda i, j: (0, j)),    # fc1 W tile
                pl.BlockSpec((1, th), lambda i, j: (0, j)),         # fc1 bias
                pl.BlockSpec((th, D_out_p), lambda i, j: (j, 0)),   # fc2 W tile
                pl.BlockSpec((1, D_out_p), lambda i, j: (0, 0)),    # fc2 bias
            ],
            out_specs=pl.BlockSpec((tm, D_out_p), lambda i, j: (i, 0)),
            scratch_shapes=[pltpu.VMEM((tm, D_out_p), jnp.float32)],
        ),
        compiler_params=pltpu.CompilerParams(
            dimension_semantics=("parallel", "arbitrary"),
            vmem_limit_bytes=vmem_limit,
        ),
        cost_estimate=cost,
    )(x2d, w1_p, b1_p, w2_p, b2_p)

    return out2d[:M, :D_out].reshape(B, S, D_out)


def init_mlp_params(key, in_features, hidden_features, out_features):
    """Deterministic init mimicking nn.Linear's uniform(-1/sqrt(fan_in), ...).
    Weights returned in (in, out) layout (transposed vs PyTorch)."""
    k1, k2, k3, k4 = jax.random.split(key, 4)
    bound1 = 1.0 / math.sqrt(in_features)
    bound2 = 1.0 / math.sqrt(hidden_features)
    w1 = jax.random.uniform(k1, (in_features, hidden_features),
                            minval=-bound1, maxval=bound1, dtype=jnp.float32)
    b1 = jax.random.uniform(k2, (hidden_features,),
                            minval=-bound1, maxval=bound1, dtype=jnp.float32)
    w2 = jax.random.uniform(k3, (hidden_features, out_features),
                            minval=-bound2, maxval=bound2, dtype=jnp.float32)
    b2 = jax.random.uniform(k4, (out_features,),
                            minval=-bound2, maxval=bound2, dtype=jnp.float32)
    return w1, b1, w2, b2


def mlp_reference(x, w1, b1, w2, b2):
    h = _gelu_exact(jnp.einsum("bsd,dh->bsh", x, w1) + b1)
    return jnp.einsum("bsh,ho->bso", h, w2) + b2


if __name__ == "__main__":
    # Small shapes: batch=2, seq=8, in_features=32, hidden=64, out=32.
    B, S, D_in, H, D_out = 2, 8, 32, 64, 32

    key = jax.random.PRNGKey(0)
    kx, kp = jax.random.split(key)
    x = jax.random.normal(kx, (B, S, D_in), dtype=jnp.float32)
    w1, b1, w2, b2 = init_mlp_params(kp, D_in, H, D_out)

    ref = mlp_reference(x, w1, b1, w2, b2)

    # Default fast path: bf16 MXU inputs, f32 accumulation.
    out_bf16 = jax.block_until_ready(mlp_forward(x, w1, b1, w2, b2))
    assert out_bf16.shape == (B, S, D_out)
    assert jnp.allclose(out_bf16, ref, atol=3e-2, rtol=3e-2), "bf16 path mismatch"

    # f32 path for a tight numerical check against the reference.
    out_f32 = jax.block_until_ready(
        mlp_forward(x, w1, b1, w2, b2, compute_dtype=jnp.float32))
    assert jnp.allclose(out_f32, ref, atol=1e-4, rtol=1e-4), "f32 path mismatch"

    print("KERNEL_OK")
</pallas_src>

<mosaic_0001>
module attributes {stable_mosaic.version = 11 : i64} {
  func.func @mlp_kernel(%arg0: i32, %arg1: i32, %arg2: memref<128x128xbf16, #tpu.memory_space<vmem>>, %arg3: memref<128x128xbf16, #tpu.memory_space<vmem>>, %arg4: memref<1x128xf32, #tpu.memory_space<vmem>>, %arg5: memref<128x128xbf16, #tpu.memory_space<vmem>>, %arg6: memref<1x128xf32, #tpu.memory_space<vmem>>, %arg7: memref<128x128xf32, #tpu.memory_space<vmem>>, %arg8: memref<128x128xf32, #tpu.memory_space<vmem>>) attributes {dimension_semantics = [#tpu.dimension_semantics<parallel>, #tpu.dimension_semantics<arbitrary>], iteration_bounds = array<i64: 1, 1>, scalar_prefetch = 0 : i64, scratch_operands = 1 : i64, tpu.core_type = #tpu.core_type<tc>, window_params = [{transform_indices = @transform_0, window_bounds = array<i64: 128, 128>}, {transform_indices = @transform_1, window_bounds = array<i64: 128, 128>}, {transform_indices = @transform_2, window_bounds = array<i64: 1, 128>}, {transform_indices = @transform_3, window_bounds = array<i64: 128, 128>}, {pipeline_mode = #tpu.pipeline_mode<synchronous>, transform_indices = @transform_4, window_bounds = array<i64: 1, 128>}, {transform_indices = @transform_5, window_bounds = array<i64: 128, 128>}]} {
    %c0_i32 = arith.constant 0 : i32
    %0 = arith.cmpi eq, %arg1, %c0_i32 : i32
    %1 = arith.extui %0 : i1 to i32
    %c0_i32_0 = arith.constant 0 : i32
    %2 = arith.cmpi ne, %1, %c0_i32_0 : i32
    scf.if %2 {
      %cst_18 = arith.constant 0.000000e+00 : f32
      %26 = vector.broadcast %cst_18 : f32 to vector<128x128xf32>
      %c0_19 = arith.constant 0 : index
      %c0_20 = arith.constant 0 : index
      %27 = vector.load %arg8[%c0_19, %c0_20] : memref<128x128xf32, #tpu.memory_space<vmem>>, vector<128x128xf32>
      tpu.vector_store %arg8[%c0_19, %c0_20], %26 {strides = array<i32>} : memref<128x128xf32, #tpu.memory_space<vmem>>, vector<128x128xf32>,
    } else {
    }
    %c0 = arith.constant 0 : index
    %c0_1 = arith.constant 0 : index
    %3 = vector.load %arg2[%c0, %c0_1] : memref<128x128xbf16, #tpu.memory_space<vmem>>, vector<128x128xbf16>
    %c0_2 = arith.constant 0 : index
    %c0_3 = arith.constant 0 : index
    %4 = vector.load %arg3[%c0_2, %c0_3] : memref<128x128xbf16, #tpu.memory_space<vmem>>, vector<128x128xbf16>
    %cst = arith.constant dense<0.000000e+00> : vector<128x128xf32>
    %5 = tpu.matmul %3, %4, %cst {dimension_numbers = #tpu.dot_dimension_numbers<[1], [0], [0], [1], [0, 0, 1, 1], [], []>} : vector<128x128xbf16>, vector<128x128xbf16>, vector<128x128xf32> -> vector<128x128xf32>
    %c0_4 = arith.constant 0 : index
    %c0_5 = arith.constant 0 : index
    %6 = vector.load %arg4[%c0_4, %c0_5] : memref<1x128xf32, #tpu.memory_space<vmem>>, vector<1x128xf32>
    %7 = vector.broadcast %6 : vector<1x128xf32> to vector<128x128xf32>
    %8 = arith.addf %5, %7 : vector<128x128xf32>
    %cst_6 = arith.constant 5.000000e-01 : f32
    %9 = vector.broadcast %cst_6 : f32 to vector<128x128xf32>
    %10 = arith.mulf %9, %8 : vector<128x128xf32>
    %cst_7 = arith.constant 0.707106769 : f32
    %11 = vector.broadcast %cst_7 : f32 to vector<128x128xf32>
    %12 = arith.mulf %8, %11 : vector<128x128xf32>
    %13 = math.erf %12 : vector<128x128xf32>
    %cst_8 = arith.constant 1.000000e+00 : f32
    %14 = vector.broadcast %cst_8 : f32 to vector<128x128xf32>
    %15 = arith.addf %14, %13 : vector<128x128xf32>
    %16 = arith.mulf %10, %15 : vector<128x128xf32>
    %c0_9 = arith.constant 0 : index
    %c0_10 = arith.constant 0 : index
    %17 = vector.load %arg8[%c0_9, %c0_10] : memref<128x128xf32, #tpu.memory_space<vmem>>, vector<128x128xf32>
    %18 = arith.truncf %16 : vector<128x128xf32> to vector<128x128xbf16>
    %c0_11 = arith.constant 0 : index
    %c0_12 = arith.constant 0 : index
    %19 = vector.load %arg5[%c0_11, %c0_12] : memref<128x128xbf16, #tpu.memory_space<vmem>>, vector<128x128xbf16>
    %cst_13 = arith.constant dense<0.000000e+00> : vector<128x128xf32>
    %20 = tpu.matmul %18, %19, %cst_13 {dimension_numbers = #tpu.dot_dimension_numbers<[1], [0], [0], [1], [0, 0, 1, 1], [], []>} : vector<128x128xbf16>, vector<128x128xbf16>, vector<128x128xf32> -> vector<128x128xf32>
    %21 = arith.addf %17, %20 : vector<128x128xf32>
    %c0_14 = arith.constant 0 : index
    %c0_15 = arith.constant 0 : index
    %22 = vector.load %arg8[%c0_14, %c0_15] : memref<128x128xf32, #tpu.memory_space<vmem>>, vector<128x128xf32>
    tpu.vector_store %arg8[%c0_14, %c0_15], %21 {strides = array<i32>} : memref<128x128xf32, #tpu.memory_space<vmem>>, vector<128x128xf32>,
    %c0_i32_16 = arith.constant 0 : i32
    %23 = arith.cmpi eq, %arg1, %c0_i32_16 : i32
    %24 = arith.extui %23 : i1 to i32
    %c0_i32_17 = arith.constant 0 : i32
    %25 = arith.cmpi ne, %24, %c0_i32_17 : i32
    scf.if %25 {
      %c0_18 = arith.constant 0 : index
      %c0_19 = arith.constant 0 : index
      %26 = vector.load %arg8[%c0_18, %c0_19] : memref<128x128xf32, #tpu.memory_space<vmem>>, vector<128x128xf32>
      %c0_20 = arith.constant 0 : index
      %c0_21 = arith.constant 0 : index
      %27 = vector.load %arg6[%c0_20, %c0_21] : memref<1x128xf32, #tpu.memory_space<vmem>>, vector<1x128xf32>
      %28 = vector.broadcast %27 : vector<1x128xf32> to vector<128x128xf32>
      %29 = arith.addf %26, %28 : vector<128x128xf32>
      %c0_22 = arith.constant 0 : index
      %c0_23 = arith.constant 0 : index
      %30 = vector.load %arg7[%c0_22, %c0_23] : memref<128x128xf32, #tpu.memory_space<vmem>>, vector<128x128xf32>
      tpu.vector_store %arg7[%c0_22, %c0_23], %29 {strides = array<i32>} : memref<128x128xf32, #tpu.memory_space<vmem>>, vector<128x128xf32>,
    } else {
    }
    return
  }
  func.func @transform_0(%arg0: i32, %arg1: i32) -> (i32, i32) {
    %c0_i32 = arith.constant 0 : i32
    %c0_i32_0 = arith.constant 0 : i32
    return %arg0, %c0_i32 : i32, i32
  }
  func.func @transform_1(%arg0: i32, %arg1: i32) -> (i32, i32) {
    %c0_i32 = arith.constant 0 : i32
    %c0_i32_0 = arith.constant 0 : i32
    return %c0_i32, %arg1 : i32, i32
  }
  func.func @transform_2(%arg0: i32, %arg1: i32) -> (i32, i32) {
    %c0_i32 = arith.constant 0 : i32
    %c0_i32_0 = arith.constant 0 : i32
    return %c0_i32, %arg1 : i32, i32
  }
  func.func @transform_3(%arg0: i32, %arg1: i32) -> (i32, i32) {
    %c0_i32 = arith.constant 0 : i32
    %c0_i32_0 = arith.constant 0 : i32
    return %arg1, %c0_i32 : i32, i32
  }
  func.func @transform_4(%arg0: i32, %arg1: i32) -> (i32, i32) {
    %c0_i32 = arith.constant 0 : i32
    %c0_i32_0 = arith.constant 0 : i32
    %c0_i32_1 = arith.constant 0 : i32
    return %c0_i32, %c0_i32_0 : i32, i32
  }
  func.func @transform_5(%arg0: i32, %arg1: i32) -> (i32, i32) {
    %c0_i32 = arith.constant 0 : i32
    %c0_i32_0 = arith.constant 0 : i32
    return %arg0, %c0_i32 : i32, i32
  }
}

</mosaic_0001>

<llo_original>
// kernel: tpu_custom_call.1
$region0: #{tpu_custom_call.1}
  #allocation0 [shape = 'u32[]', space=smem, size = 0x4, offset = 0x4, fixed_abs, tag = 'smem constant byte address 0x4 - core index']
  #allocation1 [shape = 'u32[144,128]{1,0:T(1,128)}', space=vmem, size = 0x12000, scoped, tag = 'internal scratch']
  #allocation2 [shape = 'f32[128,128]{1,0:T(8,128)}', space=vmem, size = 0x10000, scoped, tag = 'scratch operand']
  %s0 = inlined_call_operand.hbm [shape: bf16[128,128], index: 0, kind: input, shape index: {}]
  %s1 = inlined_call_operand.hbm [shape: bf16[128,128], index: 1, kind: input, shape index: {}]
  %s2 = inlined_call_operand.vmem [shape: f32[1,128], index: 2, kind: input, shape index: {}]
  %s3 = inlined_call_operand.hbm [shape: bf16[128,128], index: 3, kind: input, shape index: {}]
  %s4 = inlined_call_operand.vmem [shape: f32[1,128], index: 4, kind: input, shape index: {}]
  %s5 = inlined_call_operand.hbm [shape: f32[128,128], index: 5, kind: output, shape index: {}]
  %s6 = sld [smem:[#allocation0]]
  $region50: #{tpu_custom_call.1} parent=0
    _
  %s8 = ssub.s32 1, %s6
  %s9 = scalar_select 0, %s8, %s6
  $region1: #{tpu_custom_call.1} parent=0
    #allocation3 [shape = 'u8[32768]{0}', space=vmem, size = 0x8000, scoped, tag = 'input window, operand 0, single buffered']
    #allocation4 [shape = 's32[1]{0}', space=sflag, size = 0x4, scoped, tag = 'scoped memory for tpu_custom_call.1']
    #allocation5 [shape = 's32[1]{0}', space=sflag, size = 0x4, scoped, tag = 'scoped memory for tpu_custom_call.1']
    #allocation6 [shape = 'u8[32768]{0}', space=vmem, size = 0x8000, scoped, tag = 'input window, operand 1, single buffered']
    #allocation7 [shape = 's32[1]{0}', space=sflag, size = 0x4, scoped, tag = 'scoped memory for tpu_custom_call.1']
    #allocation8 [shape = 'u8[32768]{0}', space=vmem, size = 0x8000, scoped, tag = 'input window, operand 3, single buffered']
    #allocation9 [shape = 'u8[65536]{0}', space=vmem, size = 0x10000, scoped, tag = 'output window, operand 0, single buffered']
    %10 = vsyncpa [#allocation4], 0
    %11 = vsyncpa [#allocation7], 0
    %12 = vsyncpa [#allocation5], 0
    // Predicated region
    $region2: #{tpu_custom_call.1} parent=1 // pred_check
      _
    $region3: #{tpu_custom_call.1} parent=1 // pred_check_branch
      %14 = sbr.rel (0) target = $region5
    $region4: #{tpu_custom_call.1} parent=1 // pred_region
      %s16 = ssub.s32 1024, 1024
      %17 = vsyncadd [#allocation4], %s16
      %s18 = sshll.u32 [#allocation3], 4
      %s19 = int_to_ptr.vmem [resolvable:$true] %s18
      %24 = dma.hbm_to_vmem [thread:$0]  %s0, 1024, %s19, [#allocation4], 64, 64, 4
    $region5: #{tpu_custom_call.1} parent=1 // pred_fallthru
      _
    // Predicated region
    $region6: #{tpu_custom_call.1} parent=1 // pred_check
      _
    $region7: #{tpu_custom_call.1} parent=1 // pred_check_branch
      %26 = sbr.rel (0) target = $region9
    $region8: #{tpu_custom_call.1} parent=1 // pred_region
      %s28 = ssub.s32 1024, 1024
      %29 = vsyncadd [#allocation7], %s28
      %s30 = sshll.u32 [#allocation6], 4
      %s31 = int_to_ptr.vmem [resolvable:$true] %s30
      %36 = dma.hbm_to_vmem [thread:$0]  %s1, 1024, %s31, [#allocation7], 64, 64, 4
    $region9: #{tpu_custom_call.1} parent=1 // pred_fallthru
      _
    // Predicated region
    $region10: #{tpu_custom_call.1} parent=1 // pred_check
      _
    $region11: #{tpu_custom_call.1} parent=1 // pred_check_branch
      %38 = sbr.rel (0) target = $region13
    $region12: #{tpu_custom_call.1} parent=1 // pred_region
      _
    $region13: #{tpu_custom_call.1} parent=1 // pred_fallthru
      _
    // Predicated region
    $region14: #{tpu_custom_call.1} parent=1 // pred_check
      _
    $region15: #{tpu_custom_call.1} parent=1 // pred_check_branch
      %40 = sbr.rel (0) target = $region17
    $region16: #{tpu_custom_call.1} parent=1 // pred_region
      %s42 = ssub.s32 1024, 1024
      %43 = vsyncadd [#allocation7], %s42
      %s44 = sshll.u32 [#allocation8], 4
      %s45 = int_to_ptr.vmem [resolvable:$true] %s44
      %50 = dma.hbm_to_vmem [thread:$0]  %s3, 1024, %s45, [#allocation7], 64, 64, 4
    $region17: #{tpu_custom_call.1} parent=1 // pred_fallthru
      _
    // Predicated region
    $region18: #{tpu_custom_call.1} parent=1 // pred_check
      _
    $region19: #{tpu_custom_call.1} parent=1 // pred_check_branch
      %52 = sbr.rel (0) target = $region21
    $region20: #{tpu_custom_call.1} parent=1 // pred_region
      _
    $region21: #{tpu_custom_call.1} parent=1 // pred_fallthru
      _
    // Predicated region
    $region22: #{tpu_custom_call.1} parent=1 // pred_check
      _
    $region23: #{tpu_custom_call.1} parent=1 // pred_check_branch
      %54 = sbr.rel (0) target = $region25
    $region24: #{tpu_custom_call.1} parent=1 // pred_region
      %55 = dma.done [#allocation4], 1024
    $region25: #{tpu_custom_call.1} parent=1 // pred_fallthru
      _
    // Predicated region
    $region26: #{tpu_custom_call.1} parent=1 // pred_check
      _
    $region27: #{tpu_custom_call.1} parent=1 // pred_check_branch
      %57 = sbr.rel (0) target = $region29
    $region28: #{tpu_custom_call.1} parent=1 // pred_region
      %58 = dma.done [#allocation7], 1024
    $region29: #{tpu_custom_call.1} parent=1 // pred_fallthru
      _
    // Predicated region
    $region30: #{tpu_custom_call.1} parent=1 // pred_check
      _
    $region31: #{tpu_custom_call.1} parent=1 // pred_check_branch
      %60 = sbr.rel (0) target = $region33
    $region32: #{tpu_custom_call.1} parent=1 // pred_region
      %61 = dma.done [#allocation7], 1024
    $region33: #{tpu_custom_call.1} parent=1 // pred_fallthru
      _
    %p63 = scmp.eq.s32.totalorder 0, 0
    // Predicated region
    $region34: #{tpu_custom_call.1} parent=1 // pred_check
      %p64 = pneg %p63
    $region35: #{tpu_custom_call.1} parent=1 // pred_check_branch
      %66 = sbr.rel (%p64) target = $region37
    $region36: #{tpu_custom_call.1} parent=1 // pred_region
      %67 = vst [vmem:[#allocation2] sm:$0xff] 0.0
      %68 = vst [vmem:[#allocation2 + $0x8] sm:$0xff] 0.0
      %69 = vst [vmem:[#allocation2 + $0x10] sm:$0xff] 0.0
      %70 = vst [vmem:[#allocation2 + $0x18] sm:$0xff] 0.0
      %71 = vst [vmem:[#allocation2 + $0x20] sm:$0xff] 0.0
      %72 = vst [vmem:[#allocation2 + $0x28] sm:$0xff] 0.0
      %73 = vst [vmem:[#allocation2 + $0x30] sm:$0xff] 0.0
      %74 = vst [vmem:[#allocation2 + $0x38] sm:$0xff] 0.0
      %75 = vst [vmem:[#allocation2 + $0x40] sm:$0xff] 0.0
      %76 = vst [vmem:[#allocation2 + $0x48] sm:$0xff] 0.0
      %77 = vst [vmem:[#allocation2 + $0x50] sm:$0xff] 0.0
      %78 = vst [vmem:[#allocation2 + $0x58] sm:$0xff] 0.0
      %79 = vst [vmem:[#allocation2 + $0x60] sm:$0xff] 0.0
      %80 = vst [vmem:[#allocation2 + $0x68] sm:$0xff] 0.0
      %81 = vst [vmem:[#allocation2 + $0x70] sm:$0xff] 0.0
      %82 = vst [vmem:[#allocation2 + $0x78] sm:$0xff] 0.0
    $region37: #{tpu_custom_call.1} parent=1 // pred_fallthru
      _
    %v83 = vld [vmem:[#allocation3] sm:$0xf]
    %v84 = vld [vmem:[#allocation3 + $0x4] sm:$0xf]
    %v85 = vld [vmem:[#allocation3 + $0x8] sm:$0xf]
    %v86 = vld [vmem:[#allocation3 + $0xc] sm:$0xf]
    %v87 = vld [vmem:[#allocation3 + $0x10] sm:$0xf]
    %v88 = vld [vmem:[#allocation3 + $0x14] sm:$0xf]
    %v89 = vld [vmem:[#allocation3 + $0x18] sm:$0xf]
    %v90 = vld [vmem:[#allocation3 + $0x1c] sm:$0xf]
    %v91 = vld [vmem:[#allocation3 + $0x20] sm:$0xf]
    %v92 = vld [vmem:[#allocation3 + $0x24] sm:$0xf]
    %v93 = vld [vmem:[#allocation3 + $0x28] sm:$0xf]
    %v94 = vld [vmem:[#allocation3 + $0x2c] sm:$0xf]
    %v95 = vld [vmem:[#allocation3 + $0x30] sm:$0xf]
    %v96 = vld [vmem:[#allocation3 + $0x34] sm:$0xf]
    %v97 = vld [vmem:[#allocation3 + $0x38] sm:$0xf]
    %v98 = vld [vmem:[#allocation3 + $0x3c] sm:$0xf]
    %v99 = vld [vmem:[#allocation6] sm:$0xf]
    %v100 = vld [vmem:[#allocation6 + $0x4] sm:$0xf]
    %v101 = vld [vmem:[#allocation6 + $0x8] sm:$0xf]
    %v102 = vld [vmem:[#allocation6 + $0xc] sm:$0xf]
    %v103 = vld [vmem:[#allocation6 + $0x10] sm:$0xf]
    %v104 = vld [vmem:[#allocation6 + $0x14] sm:$0xf]
    %v105 = vld [vmem:[#allocation6 + $0x18] sm:$0xf]
    %v106 = vld [vmem:[#allocation6 + $0x1c] sm:$0xf]
    %v107 = vld [vmem:[#allocation6 + $0x20] sm:$0xf]
    %v108 = vld [vmem:[#allocation6 + $0x24] sm:$0xf]
    %v109 = vld [vmem:[#allocation6 + $0x28] sm:$0xf]
    %v110 = vld [vmem:[#allocation6 + $0x2c] sm:$0xf]
    %v111 = vld [vmem:[#allocation6 + $0x30] sm:$0xf]
    %v112 = vld [vmem:[#allocation6 + $0x34] sm:$0xf]
    %v113 = vld [vmem:[#allocation6 + $0x38] sm:$0xf]
    %v114 = vld [vmem:[#allocation6 + $0x3c] sm:$0xf]
    %v115 = vld [vmem:[%s2] sm:$0x1]
    %v117 = vlaneseq
    %v118 = vshrl.u32 %v117, 7
    %v119 = vsub.s32 0, %v118
    %v120 = vrot.slane %v115, %v119
    %v138 = vunpack.c.l.b16 %v83
    %v139 = vunpack.c.l.b16 %v84
    %v140 = vunpack.c.l.b16 %v85
    %v141 = vunpack.c.l.b16 %v86
    %v142 = vunpack.c.l.b16 %v87
    %v143 = vunpack.c.l.b16 %v88
    %v144 = vunpack.c.l.b16 %v89
    %v145 = vunpack.c.l.b16 %v90
    %v146 = vunpack.c.l.b16 %v91
    %v147 = vunpack.c.l.b16 %v92
    %v148 = vunpack.c.l.b16 %v93
    %v149 = vunpack.c.l.b16 %v94
    %v150 = vunpack.c.l.b16 %v95
    %v151 = vunpack.c.l.b16 %v96
    %v152 = vunpack.c.l.b16 %v97
    %v153 = vunpack.c.l.b16 %v98
    %v154 = vpack.c.b16 %v139, %v138
    %v155 = vpack.c.b16 %v141, %v140
    %v156 = vpack.c.b16 %v143, %v142
    %v157 = vpack.c.b16 %v145, %v144
    %v158 = vpack.c.b16 %v147, %v146
    %v159 = vpack.c.b16 %v149, %v148
    %v160 = vpack.c.b16 %v151, %v150
    %v161 = vpack.c.b16 %v153, %v152
    %v186 = vunpack.c.l.b16 %v99
    %v187 = vunpack.c.l.b16 %v100
    %v188 = vunpack.c.l.b16 %v101
    %v189 = vunpack.c.l.b16 %v102
    %v190 = vunpack.c.l.b16 %v103
    %v191 = vunpack.c.l.b16 %v104
    %v192 = vunpack.c.l.b16 %v105
    %v193 = vunpack.c.l.b16 %v106
    %v194 = vunpack.c.l.b16 %v107
    %v195 = vunpack.c.l.b16 %v108
    %v196 = vunpack.c.l.b16 %v109
    %v197 = vunpack.c.l.b16 %v110
    %v198 = vunpack.c.l.b16 %v111
    %v199 = vunpack.c.l.b16 %v112
    %v200 = vunpack.c.l.b16 %v113
    %v201 = vunpack.c.l.b16 %v114
    %v202 = vpack.c.b16 %v187, %v186
    %v203 = vpack.c.b16 %v189, %v188
    %v204 = vpack.c.b16 %v191, %v190
    %v205 = vpack.c.b16 %v193, %v192
    %v206 = vpack.c.b16 %v195, %v194
    %v207 = vpack.c.b16 %v197, %v196
    %v208 = vpack.c.b16 %v199, %v198
    %v209 = vpack.c.b16 %v201, %v200
    %218 = vmatprep.subr.bf16.mxu0 0
    %219 = vmatpush1.bf16.msra.mxu0 %v209
    %220 = vmatprep.subr.bf16.mxu0 0
    %221 = vmatpush1.bf16.msra.mxu0 %v208
    %222 = vmatprep.subr.bf16.mxu0 0
    %223 = vmatpush1.bf16.msra.mxu0 %v207
    %224 = vmatprep.subr.bf16.mxu0 0
    %225 = vmatpush1.bf16.msra.mxu0 %v206
    %226 = vmatprep.subr.bf16.mxu0 0
    %227 = vmatpush1.bf16.msra.mxu0 %v205
    %228 = vmatprep.subr.bf16.mxu0 0
    %229 = vmatpush1.bf16.msra.mxu0 %v204
    %230 = vmatprep.subr.bf16.mxu0 0
    %231 = vmatpush1.bf16.msra.mxu0 %v203
    %232 = vmatprep.subr.bf16.mxu0 0
    %233 = vmatpush1.bf16.msra.mxu0 %v202
    %234 = vmatprep.subr.bf16.mxu0 0
    %235 = vmatpush2.bf16.msra.mxu0 0
    %236 = vmatprep.subr.bf16.mxu0 0
    %237 = vmatpush2.bf16.msra.mxu0 0
    %238 = vmatprep.subr.bf16.mxu0 0
    %239 = vmatpush2.bf16.msra.mxu0 0
    %240 = vmatprep.subr.bf16.mxu0 0
    %241 = vmatpush2.bf16.msra.mxu0 0
    %242 = vmatprep.subr.bf16.mxu0 0
    %243 = vmatpush2.bf16.msra.mxu0 0
    %244 = vmatprep.subr.bf16.mxu0 0
    %245 = vmatpush2.bf16.msra.mxu0 0
    %246 = vmatprep.subr.bf16.mxu0 0
    %247 = vmatpush2.bf16.msra.mxu0 0
    %248 = vmatprep.subr.bf16.mxu0 0
    %249 = vmatpush2.bf16.msra.mxu0 0
    %250 = vmatprep.mubr.bf16.mxu0 0
    %251 = vmatmul.mubr.bf16.gmra.mxu0 %v154
    %v252 = vpop.f32.mrf.mxu0
    %v253 = vadd.f32 %v120, %v252
    %v254 = vpop.f32.mrf.mxu0
    %v255 = vpop.f32.mrf.mxu0
    %v256 = vadd.f32 %v120, %v255
    %v257 = vpop.f32.mrf.mxu0
    %258 = vmatprep.mubr.bf16.mxu0 0
    %259 = vmatmul.mubr.bf16.gmra.mxu0 %v155
    %v260 = vpop.f32.mrf.mxu0
    %v261 = vadd.f32 %v120, %v260
    %v262 = vpop.f32.mrf.mxu0
    %v263 = vpop.f32.mrf.mxu0
    %v264 = vadd.f32 %v120, %v263
    %v265 = vpop.f32.mrf.mxu0
    %266 = vmatprep.mubr.bf16.mxu0 0
    %267 = vmatmul.mubr.bf16.gmra.mxu0 %v156
    %v268 = vpop.f32.mrf.mxu0
    %v269 = vadd.f32 %v120, %v268
    %v270 = vpop.f32.mrf.mxu0
    %v271 = vpop.f32.mrf.mxu0
    %v272 = vadd.f32 %v120, %v271
    %v273 = vpop.f32.mrf.mxu0
    %274 = vmatprep.mubr.bf16.mxu0 0
    %275 = vmatmul.mubr.bf16.gmra.mxu0 %v157
    %v276 = vpop.f32.mrf.mxu0
    %v277 = vadd.f32 %v120, %v276
    %v278 = vpop.f32.mrf.mxu0
    %v279 = vpop.f32.mrf.mxu0
    %v280 = vadd.f32 %v120, %v279
    %v281 = vpop.f32.mrf.mxu0
    %282 = vmatprep.mubr.bf16.mxu0 0
    %283 = vmatmul.mubr.bf16.gmra.mxu0 %v158
    %v284 = vpop.f32.mrf.mxu0
    %v285 = vadd.f32 %v120, %v284
    %v286 = vpop.f32.mrf.mxu0
    %v287 = vpop.f32.mrf.mxu0
    %v288 = vadd.f32 %v120, %v287
    %v289 = vpop.f32.mrf.mxu0
    %290 = vmatprep.mubr.bf16.mxu0 0
    %291 = vmatmul.mubr.bf16.gmra.mxu0 %v159
    %v292 = vpop.f32.mrf.mxu0
    %v293 = vadd.f32 %v120, %v292
    %v294 = vpop.f32.mrf.mxu0
    %v295 = vpop.f32.mrf.mxu0
    %v296 = vadd.f32 %v120, %v295
    %v297 = vpop.f32.mrf.mxu0
    %298 = vmatprep.mubr.bf16.mxu0 0
    %299 = vmatmul.mubr.bf16.gmra.mxu0 %v160
    %v300 = vpop.f32.mrf.mxu0
    %v301 = vadd.f32 %v120, %v300
    %v302 = vpop.f32.mrf.mxu0
    %v303 = vpop.f32.mrf.mxu0
    %v304 = vadd.f32 %v120, %v303
    %v305 = vpop.f32.mrf.mxu0
    %306 = vmatprep.mubr.bf16.mxu0 0
    %307 = vmatmul.mubr.bf16.gmra.mxu0 %v161
    %v308 = vpop.f32.mrf.mxu0
    %v309 = vadd.f32 %v120, %v308
    %v310 = vpop.f32.mrf.mxu0
    %v311 = vpop.f32.mrf.mxu0
    %v312 = vadd.f32 %v120, %v311
    %v313 = vpop.f32.mrf.mxu0
    %314 = vdwg.mxu0
    %v315 = vmul.f32 %v253, 0.5
    %v316 = vmul.f32 %v256, 0.5
    %v317 = vmul.f32 %v261, 0.5
    %v318 = vmul.f32 %v264, 0.5
    %v319 = vmul.f32 %v269, 0.5
    %v320 = vmul.f32 %v272, 0.5
    %v321 = vmul.f32 %v277, 0.5
    %v322 = vmul.f32 %v280, 0.5
    %v323 = vmul.f32 %v285, 0.5
    %v324 = vmul.f32 %v288, 0.5
    %v325 = vmul.f32 %v293, 0.5
    %v326 = vmul.f32 %v296, 0.5
    %v327 = vmul.f32 %v301, 0.5
    %v328 = vmul.f32 %v304, 0.5
    %v329 = vmul.f32 %v309, 0.5
    %v330 = vmul.f32 %v312, 0.5
    %v331 = vmul.f32 %v253, 0.70710677
    %v332 = vmul.f32 %v256, 0.70710677
    %v333 = vmul.f32 %v261, 0.70710677
    %v334 = vmul.f32 %v264, 0.70710677
    %v335 = vmul.f32 %v269, 0.70710677
    %v336 = vmul.f32 %v272, 0.70710677
    %v337 = vmul.f32 %v277, 0.70710677
    %v338 = vmul.f32 %v280, 0.70710677
    %v339 = vmul.f32 %v285, 0.70710677
    %v340 = vmul.f32 %v288, 0.70710677
    %v341 = vmul.f32 %v293, 0.70710677
    %v342 = vmul.f32 %v296, 0.70710677
    %v343 = vmul.f32 %v301, 0.70710677
    %v344 = vmul.f32 %v304, 0.70710677
    %v345 = vmul.f32 %v309, 0.70710677
    %v346 = vmul.f32 %v312, 0.70710677
    %v347 = verf.f32.pop %v331
    %v348 = verf.f32.pop %v332
    %v349 = verf.f32.pop %v333
    %v350 = verf.f32.pop %v334
    %v351 = verf.f32.pop %v335
    %v352 = verf.f32.pop %v336
    %v353 = verf.f32.pop %v337
    %v354 = verf.f32.pop %v338
    %v355 = verf.f32.pop %v339
    %v356 = verf.f32.pop %v340
    %v357 = verf.f32.pop %v341
    %v358 = verf.f32.pop %v342
    %v359 = verf.f32.pop %v343
    %v360 = verf.f32.pop %v344
    %v361 = verf.f32.pop %v345
    %v362 = verf.f32.pop %v346
    %v363 = vadd.f32 %v347, 1.0
    %v364 = vadd.f32 %v348, 1.0
    %v365 = vadd.f32 %v349, 1.0
    %v366 = vadd.f32 %v350, 1.0
    %v367 = vadd.f32 %v351, 1.0
    %v368 = vadd.f32 %v352, 1.0
    %v369 = vadd.f32 %v353, 1.0
    %v370 = vadd.f32 %v354, 1.0
    %v371 = vadd.f32 %v355, 1.0
    %v372 = vadd.f32 %v356, 1.0
    %v373 = vadd.f32 %v357, 1.0
    %v374 = vadd.f32 %v358, 1.0
    %v375 = vadd.f32 %v359, 1.0
    %v376 = vadd.f32 %v360, 1.0
    %v377 = vadd.f32 %v361, 1.0
    %v378 = vadd.f32 %v362, 1.0
    %v379 = vmul.f32 %v315, %v363
    %v380 = vmul.f32 %v316, %v364
    %v381 = vmul.f32 %v317, %v365
    %v382 = vmul.f32 %v318, %v366
    %v383 = vmul.f32 %v319, %v367
    %v384 = vmul.f32 %v320, %v368
    %v385 = vmul.f32 %v321, %v369
    %v386 = vmul.f32 %v322, %v370
    %v387 = vmul.f32 %v323, %v371
    %v388 = vmul.f32 %v324, %v372
    %v389 = vmul.f32 %v325, %v373
    %v390 = vmul.f32 %v326, %v374
    %v391 = vmul.f32 %v327, %v375
    %v392 = vmul.f32 %v328, %v376
    %v393 = vmul.f32 %v329, %v377
    %v394 = vmul.f32 %v330, %v378
    %v395 = vld [vmem:[#allocation2] sm:$0xff]
    %v396 = vld [vmem:[#allocation2 + $0x8] sm:$0xff]
    %v397 = vld [vmem:[#allocation2 + $0x10] sm:$0xff]
    %v398 = vld [vmem:[#allocation2 + $0x18] sm:$0xff]
    %v399 = vld [vmem:[#allocation2 + $0x20] sm:$0xff]
    %v400 = vld [vmem:[#allocation2 + $0x28] sm:$0xff]
    %v401 = vld [vmem:[#allocation2 + $0x30] sm:$0xff]
    %v402 = vld [vmem:[#allocation2 + $0x38] sm:$0xff]
    %v403 = vld [vmem:[#allocation2 + $0x40] sm:$0xff]
    %v404 = vld [vmem:[#allocation2 + $0x48] sm:$0xff]
    %v405 = vld [vmem:[#allocation2 + $0x50] sm:$0xff]
    %v406 = vld [vmem:[#allocation2 + $0x58] sm:$0xff]
    %v407 = vld [vmem:[#allocation2 + $0x60] sm:$0xff]
    %v408 = vld [vmem:[#allocation2 + $0x68] sm:$0xff]
    %v409 = vld [vmem:[#allocation2 + $0x70] sm:$0xff]
    %v410 = vld [vmem:[#allocation2 + $0x78] sm:$0xff]
    %v411 = vpack.c.bf16 %v380, %v379
    %v412 = vpack.c.bf16 %v382, %v381
    %v413 = vpack.c.bf16 %v384, %v383
    %v414 = vpack.c.bf16 %v386, %v385
    %v415 = vpack.c.bf16 %v388, %v387
    %v416 = vpack.c.bf16 %v390, %v389
    %v417 = vpack.c.bf16 %v392, %v391
    %v418 = vpack.c.bf16 %v394, %v393
    %v419 = vld [vmem:[#allocation8] sm:$0xf]
    %v420 = vld [vmem:[#allocation8 + $0x4] sm:$0xf]
    %v421 = vld [vmem:[#allocation8 + $0x8] sm:$0xf]
    %v422 = vld [vmem:[#allocation8 + $0xc] sm:$0xf]
    %v423 = vld [vmem:[#allocation8 + $0x10] sm:$0xf]
    %v424 = vld [vmem:[#allocation8 + $0x14] sm:$0xf]
    %v425 = vld [vmem:[#allocation8 + $0x18] sm:$0xf]
    %v426 = vld [vmem:[#allocation8 + $0x1c] sm:$0xf]
    %v427 = vld [vmem:[#allocation8 + $0x20] sm:$0xf]
    %v428 = vld [vmem:[#allocation8 + $0x24] sm:$0xf]
    %v429 = vld [vmem:[#allocation8 + $0x28] sm:$0xf]
    %v430 = vld [vmem:[#allocation8 + $0x2c] sm:$0xf]
    %v431 = vld [vmem:[#allocation8 + $0x30] sm:$0xf]
    %v432 = vld [vmem:[#allocation8 + $0x34] sm:$0xf]
    %v433 = vld [vmem:[#allocation8 + $0x38] sm:$0xf]
    %v434 = vld [vmem:[#allocation8 + $0x3c] sm:$0xf]
    %v451 = vunpack.c.l.b16 %v419
    %v452 = vunpack.c.l.b16 %v420
    %v453 = vunpack.c.l.b16 %v421
    %v454 = vunpack.c.l.b16 %v422
    %v455 = vunpack.c.l.b16 %v423
    %v456 = vunpack.c.l.b16 %v424
    %v457 = vunpack.c.l.b16 %v425
    %v458 = vunpack.c.l.b16 %v426
    %v459 = vunpack.c.l.b16 %v427
    %v460 = vunpack.c.l.b16 %v428
    %v461 = vunpack.c.l.b16 %v429
    %v462 = vunpack.c.l.b16 %v430
    %v463 = vunpack.c.l.b16 %v431
    %v464 = vunpack.c.l.b16 %v432
    %v465 = vunpack.c.l.b16 %v433
    %v466 = vunpack.c.l.b16 %v434
    %v467 = vpack.c.b16 %v452, %v451
    %v468 = vpack.c.b16 %v454, %v453
    %v469 = vpack.c.b16 %v456, %v455
    %v470 = vpack.c.b16 %v458, %v457
    %v471 = vpack.c.b16 %v460, %v459
    %v472 = vpack.c.b16 %v462, %v461
    %v473 = vpack.c.b16 %v464, %v463
    %v474 = vpack.c.b16 %v466, %v465
    %483 = vmatprep.subr.bf16.mxu0 0
    %484 = vmatpush1.bf16.msra.mxu0 %v474
    %485 = vmatprep.subr.bf16.mxu0 0
    %486 = vmatpush1.bf16.msra.mxu0 %v473
    %487 = vmatprep.subr.bf16.mxu0 0
    %488 = vmatpush1.bf16.msra.mxu0 %v472
    %489 = vmatprep.subr.bf16.mxu0 0
    %490 = vmatpush1.bf16.msra.mxu0 %v471
    %491 = vmatprep.subr.bf16.mxu0 0
    %492 = vmatpush1.bf16.msra.mxu0 %v470
    %493 = vmatprep.subr.bf16.mxu0 0
    %494 = vmatpush1.bf16.msra.mxu0 %v469
    %495 = vmatprep.subr.bf16.mxu0 0
    %496 = vmatpush1.bf16.msra.mxu0 %v468
    %497 = vmatprep.subr.bf16.mxu0 0
    %498 = vmatpush1.bf16.msra.mxu0 %v467
    %499 = vmatprep.subr.bf16.mxu0 0
    %500 = vmatpush2.bf16.msra.mxu0 0
    %501 = vmatprep.subr.bf16.mxu0 0
    %502 = vmatpush2.bf16.msra.mxu0 0
    %503 = vmatprep.subr.bf16.mxu0 0
    %504 = vmatpush2.bf16.msra.mxu0 0
    %505 = vmatprep.subr.bf16.mxu0 0
    %506 = vmatpush2.bf16.msra.mxu0 0
    %507 = vmatprep.subr.bf16.mxu0 0
    %508 = vmatpush2.bf16.msra.mxu0 0
    %509 = vmatprep.subr.bf16.mxu0 0
    %510 = vmatpush2.bf16.msra.mxu0 0
    %511 = vmatprep.subr.bf16.mxu0 0
    %512 = vmatpush2.bf16.msra.mxu0 0
    %513 = vmatprep.subr.bf16.mxu0 0
    %514 = vmatpush2.bf16.msra.mxu0 0
    %515 = vmatprep.mubr.bf16.mxu0 0
    %516 = vmatmul.mubr.bf16.gmra.mxu0 %v411
    %v517 = vpop.f32.mrf.mxu0
    %v518 = vadd.f32 0.0, %v517
    %v519 = vpop.f32.mrf.mxu0
    %v520 = vpop.f32.mrf.mxu0
    %v521 = vadd.f32 0.0, %v520
    %v522 = vpop.f32.mrf.mxu0
    %523 = vmatprep.mubr.bf16.mxu0 0
    %524 = vmatmul.mubr.bf16.gmra.mxu0 %v412
    %v525 = vpop.f32.mrf.mxu0
    %v526 = vadd.f32 0.0, %v525
    %v527 = vpop.f32.mrf.mxu0
    %v528 = vpop.f32.mrf.mxu0
    %v529 = vadd.f32 0.0, %v528
    %v530 = vpop.f32.mrf.mxu0
    %531 = vmatprep.mubr.bf16.mxu0 0
    %532 = vmatmul.mubr.bf16.gmra.mxu0 %v413
    %v533 = vpop.f32.mrf.mxu0
    %v534 = vadd.f32 0.0, %v533
    %v535 = vpop.f32.mrf.mxu0
    %v536 = vpop.f32.mrf.mxu0
    %v537 = vadd.f32 0.0, %v536
    %v538 = vpop.f32.mrf.mxu0
    %539 = vmatprep.mubr.bf16.mxu0 0
    %540 = vmatmul.mubr.bf16.gmra.mxu0 %v414
    %v541 = vpop.f32.mrf.mxu0
    %v542 = vadd.f32 0.0, %v541
    %v543 = vpop.f32.mrf.mxu0
    %v544 = vpop.f32.mrf.mxu0
    %v545 = vadd.f32 0.0, %v544
    %v546 = vpop.f32.mrf.mxu0
    %547 = vmatprep.mubr.bf16.mxu0 0
    %548 = vmatmul.mubr.bf16.gmra.mxu0 %v415
    %v549 = vpop.f32.mrf.mxu0
    %v550 = vadd.f32 0.0, %v549
    %v551 = vpop.f32.mrf.mxu0
    %v552 = vpop.f32.mrf.mxu0
    %v553 = vadd.f32 0.0, %v552
    %v554 = vpop.f32.mrf.mxu0
    %555 = vmatprep.mubr.bf16.mxu0 0
    %556 = vmatmul.mubr.bf16.gmra.mxu0 %v416
    %v557 = vpop.f32.mrf.mxu0
    %v558 = vadd.f32 0.0, %v557
    %v559 = vpop.f32.mrf.mxu0
    %v560 = vpop.f32.mrf.mxu0
    %v561 = vadd.f32 0.0, %v560
    %v562 = vpop.f32.mrf.mxu0
    %563 = vmatprep.mubr.bf16.mxu0 0
    %564 = vmatmul.mubr.bf16.gmra.mxu0 %v417
    %v565 = vpop.f32.mrf.mxu0
    %v566 = vadd.f32 0.0, %v565
    %v567 = vpop.f32.mrf.mxu0
    %v568 = vpop.f32.mrf.mxu0
    %v569 = vadd.f32 0.0, %v568
    %v570 = vpop.f32.mrf.mxu0
    %571 = vmatprep.mubr.bf16.mxu0 0
    %572 = vmatmul.mubr.bf16.gmra.mxu0 %v418
    %v573 = vpop.f32.mrf.mxu0
    %v574 = vadd.f32 0.0, %v573
    %v575 = vpop.f32.mrf.mxu0
    %v576 = vpop.f32.mrf.mxu0
    %v577 = vadd.f32 0.0, %v576
    %v578 = vpop.f32.mrf.mxu0
    %579 = vdwg.mxu0
    %v580 = vadd.f32 %v395, %v518
    %v581 = vadd.f32 %v396, %v521
    %v582 = vadd.f32 %v397, %v526
    %v583 = vadd.f32 %v398, %v529
    %v584 = vadd.f32 %v399, %v534
    %v585 = vadd.f32 %v400, %v537
    %v586 = vadd.f32 %v401, %v542
    %v587 = vadd.f32 %v402, %v545
    %v588 = vadd.f32 %v403, %v550
    %v589 = vadd.f32 %v404, %v553
    %v590 = vadd.f32 %v405, %v558
    %v591 = vadd.f32 %v406, %v561
    %v592 = vadd.f32 %v407, %v566
    %v593 = vadd.f32 %v408, %v569
    %v594 = vadd.f32 %v409, %v574
    %v595 = vadd.f32 %v410, %v577
    %596 = vst [vmem:[#allocation2] sm:$0xff] %v580
    %597 = vst [vmem:[#allocation2 + $0x8] sm:$0xff] %v581
    %598 = vst [vmem:[#allocation2 + $0x10] sm:$0xff] %v582
    %599 = vst [vmem:[#allocation2 + $0x18] sm:$0xff] %v583
    %600 = vst [vmem:[#allocation2 + $0x20] sm:$0xff] %v584
    %601 = vst [vmem:[#allocation2 + $0x28] sm:$0xff] %v585
    %602 = vst [vmem:[#allocation2 + $0x30] sm:$0xff] %v586
    %603 = vst [vmem:[#allocation2 + $0x38] sm:$0xff] %v587
    %604 = vst [vmem:[#allocation2 + $0x40] sm:$0xff] %v588
    %605 = vst [vmem:[#allocation2 + $0x48] sm:$0xff] %v589
    %606 = vst [vmem:[#allocation2 + $0x50] sm:$0xff] %v590
    %607 = vst [vmem:[#allocation2 + $0x58] sm:$0xff] %v591
    %608 = vst [vmem:[#allocation2 + $0x60] sm:$0xff] %v592
    %609 = vst [vmem:[#allocation2 + $0x68] sm:$0xff] %v593
    %610 = vst [vmem:[#allocation2 + $0x70] sm:$0xff] %v594
    %611 = vst [vmem:[#allocation2 + $0x78] sm:$0xff] %v595
    // Predicated region
    $region38: #{tpu_custom_call.1} parent=1 // pred_check
      %p612 = pneg %p63
    $region39: #{tpu_custom_call.1} parent=1 // pred_check_branch
      %614 = sbr.rel (%p612) target = $region41
    $region40: #{tpu_custom_call.1} parent=1 // pred_region
      %v615 = vld [vmem:[#allocation2] sm:$0xff]
      %v616 = vld [vmem:[#allocation2 + $0x8] sm:$0xff]
      %v617 = vld [vmem:[#allocation2 + $0x10] sm:$0xff]
      %v618 = vld [vmem:[#allocation2 + $0x18] sm:$0xff]
      %v619 = vld [vmem:[#allocation2 + $0x20] sm:$0xff]
      %v620 = vld [vmem:[#allocation2 + $0x28] sm:$0xff]
      %v621 = vld [vmem:[#allocation2 + $0x30] sm:$0xff]
      %v622 = vld [vmem:[#allocation2 + $0x38] sm:$0xff]
      %v623 = vld [vmem:[#allocation2 + $0x40] sm:$0xff]
      %v624 = vld [vmem:[#allocation2 + $0x48] sm:$0xff]
      %v625 = vld [vmem:[#allocation2 + $0x50] sm:$0xff]
      %v626 = vld [vmem:[#allocation2 + $0x58] sm:$0xff]
      %v627 = vld [vmem:[#allocation2 + $0x60] sm:$0xff]
      %v628 = vld [vmem:[#allocation2 + $0x68] sm:$0xff]
      %v629 = vld [vmem:[#allocation2 + $0x70] sm:$0xff]
      %v630 = vld [vmem:[#allocation2 + $0x78] sm:$0xff]
      %v631 = vld [vmem:[%s4] sm:$0x1]
      %v633 = vlaneseq
      %v634 = vshrl.u32 %v633, 7
      %v635 = vsub.s32 0, %v634
      %v636 = vrot.slane %v631, %v635
      %v638 = vadd.f32 %v615, %v636
      %v639 = vadd.f32 %v616, %v636
      %v640 = vadd.f32 %v617, %v636
      %v641 = vadd.f32 %v618, %v636
      %v642 = vadd.f32 %v619, %v636
      %v643 = vadd.f32 %v620, %v636
      %v644 = vadd.f32 %v621, %v636
      %v645 = vadd.f32 %v622, %v636
      %v646 = vadd.f32 %v623, %v636
      %v647 = vadd.f32 %v624, %v636
      %v648 = vadd.f32 %v625, %v636
      %v649 = vadd.f32 %v626, %v636
      %v650 = vadd.f32 %v627, %v636
      %v651 = vadd.f32 %v628, %v636
      %v652 = vadd.f32 %v629, %v636
      %v653 = vadd.f32 %v630, %v636
      %654 = vst [vmem:[#allocation9] sm:$0xff] %v638
      %655 = vst [vmem:[#allocation9 + $0x8] sm:$0xff] %v639
      %656 = vst [vmem:[#allocation9 + $0x10] sm:$0xff] %v640
      %657 = vst [vmem:[#allocation9 + $0x18] sm:$0xff] %v641
      %658 = vst [vmem:[#allocation9 + $0x20] sm:$0xff] %v642
      %659 = vst [vmem:[#allocation9 + $0x28] sm:$0xff] %v643
      %660 = vst [vmem:[#allocation9 + $0x30] sm:$0xff] %v644
      %661 = vst [vmem:[#allocation9 + $0x38] sm:$0xff] %v645
      %662 = vst [vmem:[#allocation9 + $0x40] sm:$0xff] %v646
      %663 = vst [vmem:[#allocation9 + $0x48] sm:$0xff] %v647
      %664 = vst [vmem:[#allocation9 + $0x50] sm:$0xff] %v648
      %665 = vst [vmem:[#allocation9 + $0x58] sm:$0xff] %v649
      %666 = vst [vmem:[#allocation9 + $0x60] sm:$0xff] %v650
      %667 = vst [vmem:[#allocation9 + $0x68] sm:$0xff] %v651
      %668 = vst [vmem:[#allocation9 + $0x70] sm:$0xff] %v652
      %669 = vst [vmem:[#allocation9 + $0x78] sm:$0xff] %v653
    $region41: #{tpu_custom_call.1} parent=1 // pred_fallthru
      _
    // Predicated region
    $region42: #{tpu_custom_call.1} parent=1 // pred_check
      _
    $region43: #{tpu_custom_call.1} parent=1 // pred_check_branch
      %671 = sbr.rel (0) target = $region45
    $region44: #{tpu_custom_call.1} parent=1 // pred_region
      %s673 = ssub.s32 2048, 2048
      %674 = vsyncadd [#allocation5], %s673
      %s675 = sshll.u32 [#allocation9], 4
      %s676 = int_to_ptr.vmem [resolvable:$true] %s675
      %681 = dma.vmem_to_hbm [thread:$0]  %s676, 2048, %s5, [#allocation5], 128, 128, 8
    $region45: #{tpu_custom_call.1} parent=1 // pred_fallthru
      _
    // Predicated region
    $region46: #{tpu_custom_call.1} parent=1 // pred_check
      _
    $region47: #{tpu_custom_call.1} parent=1 // pred_check_branch
      %683 = sbr.rel (0) target = $region49
    $region48: #{tpu_custom_call.1} parent=1 // pred_region
      %684 = dma.done [#allocation5], 2048
    $region49: #{tpu_custom_call.1} parent=1 // pred_fallthru
      _
    %685 = vsyncpa [#allocation4], 1
    %686 = vsyncpa [#allocation7], 1
    %687 = vsyncpa [#allocation5], 1

</llo_original>
